<compile_context>
chip_gen: v5e
topology: v5e:2x2
jax: 0.10.0
libtpu: 0.0.40
codegen_flags: <defaults>
</compile_context>

<pallas_src>
import functools

import jax
import jax.numpy as jnp
from jax import lax
from jax.experimental import pallas as pl
from jax.experimental.pallas import tpu as pltpu


def lstm_linear_kernel(xw_ref, whh_ref, wlin_ref, blin_ref, out_ref, h_all_ref):
    """LSTM recurrence over precomputed gate pre-activations + one final Linear.

    xw_ref:    (T, B, 4H) float32  x @ W_ih^T + (b_ih + b_hh), time-major
    whh_ref:   (H, 4H)    float32  hidden->gates weights (transposed)
    wlin_ref:  (H, 1)     float32  final Linear weight (transposed)
    blin_ref:  (1,)       float32  final Linear bias (SMEM scalar)
    out_ref:   (T*B, 1)   float32  Linear(h_t) for every (t, b), time-major
    h_all_ref: (T, B, H)  float32  VMEM scratch holding all hidden states
    """
    T, B, _ = xw_ref.shape
    H = whh_ref.shape[0]

    whh = whh_ref[...]  # hoisted: read once, reused every step

    def step(t, carry):
        h, c = carry
        # Single MXU push on the serial critical path: (B, H) @ (H, 4H).
        gates = xw_ref[t] + jnp.dot(h, whh, preferred_element_type=jnp.float32)
        # One full-vreg sigmoid (i, f, o lanes are the useful ones), slice after.
        sig = jax.nn.sigmoid(gates)
        i_g = sig[:, 0 * H:1 * H]
        f_g = sig[:, 1 * H:2 * H]
        o_g = sig[:, 3 * H:4 * H]
        g_g = jnp.tanh(gates[:, 2 * H:3 * H])
        c_new = f_g * c + i_g * g_g
        h_new = o_g * jnp.tanh(c_new)
        h_all_ref[t] = h_new
        return h_new, c_new

    h0 = jnp.zeros((B, H), jnp.float32)
    c0 = jnp.zeros((B, H), jnp.float32)
    # T is static and small -> fully unroll so the LLO scheduler can overlap
    # the matmul, EUP activations and VMEM stores across iterations.
    lax.fori_loop(0, T, step, (h0, c0), unroll=True)

    # Final Linear(H -> 1) for ALL time steps in one matmul + one store.
    h_flat = h_all_ref[...].reshape(T * B, H)
    out_ref[...] = (
        jnp.dot(h_flat, wlin_ref[...], preferred_element_type=jnp.float32)
        + blin_ref[0]
    )


@functools.partial(jax.jit, static_argnames=())
def simple_lstm_forward(x, wih_t, whh_t, bias, wlin_t, blin):
    """x: (B, T, I) batch_first input, like the PyTorch module.  Returns (B, T, 1)."""
    B, T, I = x.shape
    H = whh_t.shape[0]

    # Input projection + bias for all timesteps, fused with the
    # batch_first -> time-major transpose: (B, T, I) x (I, 4H) -> (T, B, 4H).
    xw = jnp.einsum("bti,ig->tbg", x, wih_t) + bias  # lane-dense: 4H = 128

    out_flat = pl.pallas_call(
        lstm_linear_kernel,
        out_shape=jax.ShapeDtypeStruct((T * B, 1), jnp.float32),
        in_specs=[
            pl.BlockSpec(memory_space=pltpu.MemorySpace.VMEM),  # xw (T, B, 4H)
            pl.BlockSpec(memory_space=pltpu.MemorySpace.VMEM),  # whh (H, 4H)
            pl.BlockSpec(memory_space=pltpu.MemorySpace.VMEM),  # wlin (H, 1)
            pl.BlockSpec(memory_space=pltpu.MemorySpace.SMEM),  # blin (1,)
        ],
        out_specs=pl.BlockSpec(memory_space=pltpu.MemorySpace.VMEM),
        scratch_shapes=[pltpu.VMEM((T, B, H), jnp.float32)],
    )(xw, whh_t, wlin_t, blin)

    # (T*B, 1) time-major -> (B, T, 1) batch_first.
    return jnp.transpose(out_flat.reshape(T, B, 1), (1, 0, 2))


def reference_forward(x, wih_t, whh_t, bias, wlin_t, blin):
    """Pure-JAX reference (same math, lax.scan) for a correctness check."""
    B, T, I = x.shape
    H = whh_t.shape[0]

    def step(carry, x_t):
        h, c = carry
        gates = x_t @ wih_t + h @ whh_t + bias
        i_g = jax.nn.sigmoid(gates[:, 0 * H:1 * H])
        f_g = jax.nn.sigmoid(gates[:, 1 * H:2 * H])
        g_g = jnp.tanh(gates[:, 2 * H:3 * H])
        o_g = jax.nn.sigmoid(gates[:, 3 * H:4 * H])
        c = f_g * c + i_g * g_g
        h = o_g * jnp.tanh(c)
        return (h, c), h @ wlin_t + blin.reshape(1, 1)

    h0 = jnp.zeros((B, H), jnp.float32)
    c0 = jnp.zeros((B, H), jnp.float32)
    _, ys = lax.scan(step, (h0, c0), jnp.transpose(x, (1, 0, 2)))
    return jnp.transpose(ys, (1, 0, 2))


if __name__ == "__main__":
    # Small shapes consistent with Simple_LSTM(input_size=1, hidden_size=H).
    B, T, I, H = 8, 8, 1, 32

    key = jax.random.PRNGKey(0)
    k_x, k_wih, k_whh, k_bih, k_bhh, k_wl, k_bl = jax.random.split(key, 7)

    # Deterministic params, PyTorch-style uniform(-1/sqrt(H), 1/sqrt(H)) init.
    bound = 1.0 / jnp.sqrt(jnp.float32(H))
    weight_ih = jax.random.uniform(k_wih, (4 * H, I), jnp.float32, -bound, bound)
    weight_hh = jax.random.uniform(k_whh, (4 * H, H), jnp.float32, -bound, bound)
    bias_ih = jax.random.uniform(k_bih, (4 * H,), jnp.float32, -bound, bound)
    bias_hh = jax.random.uniform(k_bhh, (4 * H,), jnp.float32, -bound, bound)
    lin_w = jax.random.uniform(k_wl, (1, H), jnp.float32, -bound, bound)
    lin_b = jax.random.uniform(k_bl, (1,), jnp.float32, -bound, bound)

    # Kernel-side parameter layout (transposed, biases combined).
    wih_t = weight_ih.T                        # (I, 4H)
    whh_t = weight_hh.T                        # (H, 4H)
    bias = (bias_ih + bias_hh).reshape(1, 4 * H)
    wlin_t = lin_w.T                           # (H, 1)
    blin = lin_b                               # (1,) scalar for SMEM

    x = jax.random.normal(k_x, (B, T, I), jnp.float32)

    out = simple_lstm_forward(x, wih_t, whh_t, bias, wlin_t, blin)
    out = jax.block_until_ready(out)
    assert out.shape == (B, T, 1), out.shape

    ref = reference_forward(x, wih_t, whh_t, bias, wlin_t, blin)
    assert jnp.allclose(out, ref, atol=1e-4, rtol=1e-4), "mismatch vs JAX reference"

    print("KERNEL_OK")
</pallas_src>

<mosaic_0001>
module attributes {stable_mosaic.version = 11 : i64} {
  func.func @lstm_linear_kernel(%arg0: memref<8x8x128xf32, #tpu.memory_space<vmem>>, %arg1: memref<32x128xf32, #tpu.memory_space<vmem>>, %arg2: memref<32x1xf32, #tpu.memory_space<vmem>>, %arg3: memref<1xf32, #tpu.memory_space<smem>>, %arg4: memref<64x1xf32, #tpu.memory_space<vmem>>, %arg5: memref<8x8x32xf32, #tpu.memory_space<vmem>>) attributes {dimension_semantics = [], scalar_prefetch = 0 : i64, scratch_operands = 1 : i64, tpu.core_type = #tpu.core_type<tc>} {
    %c0 = arith.constant 0 : index
    %c0_0 = arith.constant 0 : index
    %0 = vector.load %arg1[%c0, %c0_0] : memref<32x128xf32, #tpu.memory_space<vmem>>, vector<32x128xf32>
    %cst = arith.constant 0.000000e+00 : f32
    %1 = vector.broadcast %cst : f32 to vector<8x32xf32>
    %cst_1 = arith.constant 0.000000e+00 : f32
    %2 = vector.broadcast %cst_1 : f32 to vector<8x32xf32>
    %c0_i32 = arith.constant 0 : i32
    %3 = arith.index_cast %c0_i32 : i32 to index
    %c0_2 = arith.constant 0 : index
    %c0_3 = arith.constant 0 : index
    %4 = vector.load %arg0[%3, %c0_2, %c0_3] : memref<8x8x128xf32, #tpu.memory_space<vmem>>, vector<1x8x128xf32>
    %5 = vector.shape_cast %4 : vector<1x8x128xf32> to vector<8x128xf32>
    %cst_4 = arith.constant dense<0.000000e+00> : vector<8x128xf32>
    %6 = tpu.matmul %1, %0, %cst_4 {dimension_numbers = #tpu.dot_dimension_numbers<[1], [0], [0], [1], [0, 0, 1, 1], [], []>} : vector<8x32xf32>, vector<32x128xf32>, vector<8x128xf32> -> vector<8x128xf32>
    %7 = arith.addf %5, %6 : vector<8x128xf32>
    %8 = arith.negf %7 : vector<8x128xf32>
    %9 = math.exp %8 : vector<8x128xf32>
    %cst_5 = arith.constant 1.000000e+00 : f32
    %10 = vector.broadcast %cst_5 : f32 to vector<8x128xf32>
    %11 = arith.addf %10, %9 : vector<8x128xf32>
    %12 = arith.divf %10, %11 : vector<8x128xf32>
    %13 = vector.extract_strided_slice %12 {offsets = [0, 0], sizes = [8, 32], strides = [1, 1]} : vector<8x128xf32> to vector<8x32xf32>
    %14 = vector.extract_strided_slice %12 {offsets = [0, 32], sizes = [8, 32], strides = [1, 1]} : vector<8x128xf32> to vector<8x32xf32>
    %15 = vector.extract_strided_slice %12 {offsets = [0, 96], sizes = [8, 32], strides = [1, 1]} : vector<8x128xf32> to vector<8x32xf32>
    %16 = vector.extract_strided_slice %7 {offsets = [0, 64], sizes = [8, 32], strides = [1, 1]} : vector<8x128xf32> to vector<8x32xf32>
    %17 = math.tanh %16 : vector<8x32xf32>
    %18 = arith.mulf %14, %2 : vector<8x32xf32>
    %19 = arith.mulf %13, %17 : vector<8x32xf32>
    %20 = arith.addf %18, %19 : vector<8x32xf32>
    %21 = math.tanh %20 : vector<8x32xf32>
    %22 = arith.mulf %15, %21 : vector<8x32xf32>
    %23 = arith.index_cast %c0_i32 : i32 to index
    %c0_6 = arith.constant 0 : index
    %c0_7 = arith.constant 0 : index
    %24 = vector.load %arg5[%23, %c0_6, %c0_7] : memref<8x8x32xf32, #tpu.memory_space<vmem>>, vector<1x8x32xf32>
    %25 = vector.shape_cast %24 : vector<1x8x32xf32> to vector<8x32xf32>
    %26 = vector.shape_cast %22 : vector<8x32xf32> to vector<1x8x32xf32>
    tpu.vector_store %arg5[%23, %c0_6, %c0_7], %26 {strides = array<i32>} : memref<8x8x32xf32, #tpu.memory_space<vmem>>, vector<1x8x32xf32>,
    %c1_i32 = arith.constant 1 : i32
    %27 = arith.index_cast %c1_i32 : i32 to index
    %c0_8 = arith.constant 0 : index
    %c0_9 = arith.constant 0 : index
    %28 = vector.load %arg0[%27, %c0_8, %c0_9] : memref<8x8x128xf32, #tpu.memory_space<vmem>>, vector<1x8x128xf32>
    %29 = vector.shape_cast %28 : vector<1x8x128xf32> to vector<8x128xf32>
    %cst_10 = arith.constant dense<0.000000e+00> : vector<8x128xf32>
    %30 = tpu.matmul %22, %0, %cst_10 {dimension_numbers = #tpu.dot_dimension_numbers<[1], [0], [0], [1], [0, 0, 1, 1], [], []>} : vector<8x32xf32>, vector<32x128xf32>, vector<8x128xf32> -> vector<8x128xf32>
    %31 = arith.addf %29, %30 : vector<8x128xf32>
    %32 = arith.negf %31 : vector<8x128xf32>
    %33 = math.exp %32 : vector<8x128xf32>
    %cst_11 = arith.constant 1.000000e+00 : f32
    %34 = vector.broadcast %cst_11 : f32 to vector<8x128xf32>
    %35 = arith.addf %34, %33 : vector<8x128xf32>
    %36 = arith.divf %34, %35 : vector<8x128xf32>
    %37 = vector.extract_strided_slice %36 {offsets = [0, 0], sizes = [8, 32], strides = [1, 1]} : vector<8x128xf32> to vector<8x32xf32>
    %38 = vector.extract_strided_slice %36 {offsets = [0, 32], sizes = [8, 32], strides = [1, 1]} : vector<8x128xf32> to vector<8x32xf32>
    %39 = vector.extract_strided_slice %36 {offsets = [0, 96], sizes = [8, 32], strides = [1, 1]} : vector<8x128xf32> to vector<8x32xf32>
    %40 = vector.extract_strided_slice %31 {offsets = [0, 64], sizes = [8, 32], strides = [1, 1]} : vector<8x128xf32> to vector<8x32xf32>
    %41 = math.tanh %40 : vector<8x32xf32>
    %42 = arith.mulf %38, %20 : vector<8x32xf32>
    %43 = arith.mulf %37, %41 : vector<8x32xf32>
    %44 = arith.addf %42, %43 : vector<8x32xf32>
    %45 = math.tanh %44 : vector<8x32xf32>
    %46 = arith.mulf %39, %45 : vector<8x32xf32>
    %47 = arith.index_cast %c1_i32 : i32 to index
    %c0_12 = arith.constant 0 : index
    %c0_13 = arith.constant 0 : index
    %48 = vector.load %arg5[%47, %c0_12, %c0_13] : memref<8x8x32xf32, #tpu.memory_space<vmem>>, vector<1x8x32xf32>
    %49 = vector.shape_cast %48 : vector<1x8x32xf32> to vector<8x32xf32>
    %50 = vector.shape_cast %46 : vector<8x32xf32> to vector<1x8x32xf32>
    tpu.vector_store %arg5[%47, %c0_12, %c0_13], %50 {strides = array<i32>} : memref<8x8x32xf32, #tpu.memory_space<vmem>>, vector<1x8x32xf32>,
    %c2_i32 = arith.constant 2 : i32
    %51 = arith.index_cast %c2_i32 : i32 to index
    %c0_14 = arith.constant 0 : index
    %c0_15 = arith.constant 0 : index
    %52 = vector.load %arg0[%51, %c0_14, %c0_15] : memref<8x8x128xf32, #tpu.memory_space<vmem>>, vector<1x8x128xf32>
    %53 = vector.shape_cast %52 : vector<1x8x128xf32> to vector<8x128xf32>
    %cst_16 = arith.constant dense<0.000000e+00> : vector<8x128xf32>
    %54 = tpu.matmul %46, %0, %cst_16 {dimension_numbers = #tpu.dot_dimension_numbers<[1], [0], [0], [1], [0, 0, 1, 1], [], []>} : vector<8x32xf32>, vector<32x128xf32>, vector<8x128xf32> -> vector<8x128xf32>
    %55 = arith.addf %53, %54 : vector<8x128xf32>
    %56 = arith.negf %55 : vector<8x128xf32>
    %57 = math.exp %56 : vector<8x128xf32>
    %cst_17 = arith.constant 1.000000e+00 : f32
    %58 = vector.broadcast %cst_17 : f32 to vector<8x128xf32>
    %59 = arith.addf %58, %57 : vector<8x128xf32>
    %60 = arith.divf %58, %59 : vector<8x128xf32>
    %61 = vector.extract_strided_slice %60 {offsets = [0, 0], sizes = [8, 32], strides = [1, 1]} : vector<8x128xf32> to vector<8x32xf32>
    %62 = vector.extract_strided_slice %60 {offsets = [0, 32], sizes = [8, 32], strides = [1, 1]} : vector<8x128xf32> to vector<8x32xf32>
    %63 = vector.extract_strided_slice %60 {offsets = [0, 96], sizes = [8, 32], strides = [1, 1]} : vector<8x128xf32> to vector<8x32xf32>
    %64 = vector.extract_strided_slice %55 {offsets = [0, 64], sizes = [8, 32], strides = [1, 1]} : vector<8x128xf32> to vector<8x32xf32>
    %65 = math.tanh %64 : vector<8x32xf32>
    %66 = arith.mulf %62, %44 : vector<8x32xf32>
    %67 = arith.mulf %61, %65 : vector<8x32xf32>
    %68 = arith.addf %66, %67 : vector<8x32xf32>
    %69 = math.tanh %68 : vector<8x32xf32>
    %70 = arith.mulf %63, %69 : vector<8x32xf32>
    %71 = arith.index_cast %c2_i32 : i32 to index
    %c0_18 = arith.constant 0 : index
    %c0_19 = arith.constant 0 : index
    %72 = vector.load %arg5[%71, %c0_18, %c0_19] : memref<8x8x32xf32, #tpu.memory_space<vmem>>, vector<1x8x32xf32>
    %73 = vector.shape_cast %72 : vector<1x8x32xf32> to vector<8x32xf32>
    %74 = vector.shape_cast %70 : vector<8x32xf32> to vector<1x8x32xf32>
    tpu.vector_store %arg5[%71, %c0_18, %c0_19], %74 {strides = array<i32>} : memref<8x8x32xf32, #tpu.memory_space<vmem>>, vector<1x8x32xf32>,
    %c3_i32 = arith.constant 3 : i32
    %75 = arith.index_cast %c3_i32 : i32 to index
    %c0_20 = arith.constant 0 : index
    %c0_21 = arith.constant 0 : index
    %76 = vector.load %arg0[%75, %c0_20, %c0_21] : memref<8x8x128xf32, #tpu.memory_space<vmem>>, vector<1x8x128xf32>
    %77 = vector.shape_cast %76 : vector<1x8x128xf32> to vector<8x128xf32>
    %cst_22 = arith.constant dense<0.000000e+00> : vector<8x128xf32>
    %78 = tpu.matmul %70, %0, %cst_22 {dimension_numbers = #tpu.dot_dimension_numbers<[1], [0], [0], [1], [0, 0, 1, 1], [], []>} : vector<8x32xf32>, vector<32x128xf32>, vector<8x128xf32> -> vector<8x128xf32>
    %79 = arith.addf %77, %78 : vector<8x128xf32>
    %80 = arith.negf %79 : vector<8x128xf32>
    %81 = math.exp %80 : vector<8x128xf32>
    %cst_23 = arith.constant 1.000000e+00 : f32
    %82 = vector.broadcast %cst_23 : f32 to vector<8x128xf32>
    %83 = arith.addf %82, %81 : vector<8x128xf32>
    %84 = arith.divf %82, %83 : vector<8x128xf32>
    %85 = vector.extract_strided_slice %84 {offsets = [0, 0], sizes = [8, 32], strides = [1, 1]} : vector<8x128xf32> to vector<8x32xf32>
    %86 = vector.extract_strided_slice %84 {offsets = [0, 32], sizes = [8, 32], strides = [1, 1]} : vector<8x128xf32> to vector<8x32xf32>
    %87 = vector.extract_strided_slice %84 {offsets = [0, 96], sizes = [8, 32], strides = [1, 1]} : vector<8x128xf32> to vector<8x32xf32>
    %88 = vector.extract_strided_slice %79 {offsets = [0, 64], sizes = [8, 32], strides = [1, 1]} : vector<8x128xf32> to vector<8x32xf32>
    %89 = math.tanh %88 : vector<8x32xf32>
    %90 = arith.mulf %86, %68 : vector<8x32xf32>
    %91 = arith.mulf %85, %89 : vector<8x32xf32>
    %92 = arith.addf %90, %91 : vector<8x32xf32>
    %93 = math.tanh %92 : vector<8x32xf32>
    %94 = arith.mulf %87, %93 : vector<8x32xf32>
    %95 = arith.index_cast %c3_i32 : i32 to index
    %c0_24 = arith.constant 0 : index
    %c0_25 = arith.constant 0 : index
    %96 = vector.load %arg5[%95, %c0_24, %c0_25] : memref<8x8x32xf32, #tpu.memory_space<vmem>>, vector<1x8x32xf32>
    %97 = vector.shape_cast %96 : vector<1x8x32xf32> to vector<8x32xf32>
    %98 = vector.shape_cast %94 : vector<8x32xf32> to vector<1x8x32xf32>
    tpu.vector_store %arg5[%95, %c0_24, %c0_25], %98 {strides = array<i32>} : memref<8x8x32xf32, #tpu.memory_space<vmem>>, vector<1x8x32xf32>,
    %c4_i32 = arith.constant 4 : i32
    %99 = arith.index_cast %c4_i32 : i32 to index
    %c0_26 = arith.constant 0 : index
    %c0_27 = arith.constant 0 : index
    %100 = vector.load %arg0[%99, %c0_26, %c0_27] : memref<8x8x128xf32, #tpu.memory_space<vmem>>, vector<1x8x128xf32>
    %101 = vector.shape_cast %100 : vector<1x8x128xf32> to vector<8x128xf32>
    %cst_28 = arith.constant dense<0.000000e+00> : vector<8x128xf32>
    %102 = tpu.matmul %94, %0, %cst_28 {dimension_numbers = #tpu.dot_dimension_numbers<[1], [0], [0], [1], [0, 0, 1, 1], [], []>} : vector<8x32xf32>, vector<32x128xf32>, vector<8x128xf32> -> vector<8x128xf32>
    %103 = arith.addf %101, %102 : vector<8x128xf32>
    %104 = arith.negf %103 : vector<8x128xf32>
    %105 = math.exp %104 : vector<8x128xf32>
    %cst_29 = arith.constant 1.000000e+00 : f32
    %106 = vector.broadcast %cst_29 : f32 to vector<8x128xf32>
    %107 = arith.addf %106, %105 : vector<8x128xf32>
    %108 = arith.divf %106, %107 : vector<8x128xf32>
    %109 = vector.extract_strided_slice %108 {offsets = [0, 0], sizes = [8, 32], strides = [1, 1]} : vector<8x128xf32> to vector<8x32xf32>
    %110 = vector.extract_strided_slice %108 {offsets = [0, 32], sizes = [8, 32], strides = [1, 1]} : vector<8x128xf32> to vector<8x32xf32>
    %111 = vector.extract_strided_slice %108 {offsets = [0, 96], sizes = [8, 32], strides = [1, 1]} : vector<8x128xf32> to vector<8x32xf32>
    %112 = vector.extract_strided_slice %103 {offsets = [0, 64], sizes = [8, 32], strides = [1, 1]} : vector<8x128xf32> to vector<8x32xf32>
    %113 = math.tanh %112 : vector<8x32xf32>
    %114 = arith.mulf %110, %92 : vector<8x32xf32>
    %115 = arith.mulf %109, %113 : vector<8x32xf32>
    %116 = arith.addf %114, %115 : vector<8x32xf32>
    %117 = math.tanh %116 : vector<8x32xf32>
    %118 = arith.mulf %111, %117 : vector<8x32xf32>
    %119 = arith.index_cast %c4_i32 : i32 to index
    %c0_30 = arith.constant 0 : index
    %c0_31 = arith.constant 0 : index
    %120 = vector.load %arg5[%119, %c0_30, %c0_31] : memref<8x8x32xf32, #tpu.memory_space<vmem>>, vector<1x8x32xf32>
    %121 = vector.shape_cast %120 : vector<1x8x32xf32> to vector<8x32xf32>
    %122 = vector.shape_cast %118 : vector<8x32xf32> to vector<1x8x32xf32>
    tpu.vector_store %arg5[%119, %c0_30, %c0_31], %122 {strides = array<i32>} : memref<8x8x32xf32, #tpu.memory_space<vmem>>, vector<1x8x32xf32>,
    %c5_i32 = arith.constant 5 : i32
    %123 = arith.index_cast %c5_i32 : i32 to index
    %c0_32 = arith.constant 0 : index
    %c0_33 = arith.constant 0 : index
    %124 = vector.load %arg0[%123, %c0_32, %c0_33] : memref<8x8x128xf32, #tpu.memory_space<vmem>>, vector<1x8x128xf32>
    %125 = vector.shape_cast %124 : vector<1x8x128xf32> to vector<8x128xf32>
    %cst_34 = arith.constant dense<0.000000e+00> : vector<8x128xf32>
    %126 = tpu.matmul %118, %0, %cst_34 {dimension_numbers = #tpu.dot_dimension_numbers<[1], [0], [0], [1], [0, 0, 1, 1], [], []>} : vector<8x32xf32>, vector<32x128xf32>, vector<8x128xf32> -> vector<8x128xf32>
    %127 = arith.addf %125, %126 : vector<8x128xf32>
    %128 = arith.negf %127 : vector<8x128xf32>
    %129 = math.exp %128 : vector<8x128xf32>
    %cst_35 = arith.constant 1.000000e+00 : f32
    %130 = vector.broadcast %cst_35 : f32 to vector<8x128xf32>
    %131 = arith.addf %130, %129 : vector<8x128xf32>
    %132 = arith.divf %130, %131 : vector<8x128xf32>
    %133 = vector.extract_strided_slice %132 {offsets = [0, 0], sizes = [8, 32], strides = [1, 1]} : vector<8x128xf32> to vector<8x32xf32>
    %134 = vector.extract_strided_slice %132 {offsets = [0, 32], sizes = [8, 32], strides = [1, 1]} : vector<8x128xf32> to vector<8x32xf32>
    %135 = vector.extract_strided_slice %132 {offsets = [0, 96], sizes = [8, 32], strides = [1, 1]} : vector<8x128xf32> to vector<8x32xf32>
    %136 = vector.extract_strided_slice %127 {offsets = [0, 64], sizes = [8, 32], strides = [1, 1]} : vector<8x128xf32> to vector<8x32xf32>
    %137 = math.tanh %136 : vector<8x32xf32>
    %138 = arith.mulf %134, %116 : vector<8x32xf32>
    %139 = arith.mulf %133, %137 : vector<8x32xf32>
    %140 = arith.addf %138, %139 : vector<8x32xf32>
    %141 = math.tanh %140 : vector<8x32xf32>
    %142 = arith.mulf %135, %141 : vector<8x32xf32>
    %143 = arith.index_cast %c5_i32 : i32 to index
    %c0_36 = arith.constant 0 : index
    %c0_37 = arith.constant 0 : index
    %144 = vector.load %arg5[%143, %c0_36, %c0_37] : memref<8x8x32xf32, #tpu.memory_space<vmem>>, vector<1x8x32xf32>
    %145 = vector.shape_cast %144 : vector<1x8x32xf32> to vector<8x32xf32>
    %146 = vector.shape_cast %142 : vector<8x32xf32> to vector<1x8x32xf32>
    tpu.vector_store %arg5[%143, %c0_36, %c0_37], %146 {strides = array<i32>} : memref<8x8x32xf32, #tpu.memory_space<vmem>>, vector<1x8x32xf32>,
    %c6_i32 = arith.constant 6 : i32
    %147 = arith.index_cast %c6_i32 : i32 to index
    %c0_38 = arith.constant 0 : index
    %c0_39 = arith.constant 0 : index
    %148 = vector.load %arg0[%147, %c0_38, %c0_39] : memref<8x8x128xf32, #tpu.memory_space<vmem>>, vector<1x8x128xf32>
    %149 = vector.shape_cast %148 : vector<1x8x128xf32> to vector<8x128xf32>
    %cst_40 = arith.constant dense<0.000000e+00> : vector<8x128xf32>
    %150 = tpu.matmul %142, %0, %cst_40 {dimension_numbers = #tpu.dot_dimension_numbers<[1], [0], [0], [1], [0, 0, 1, 1], [], []>} : vector<8x32xf32>, vector<32x128xf32>, vector<8x128xf32> -> vector<8x128xf32>
    %151 = arith.addf %149, %150 : vector<8x128xf32>
    %152 = arith.negf %151 : vector<8x128xf32>
    %153 = math.exp %152 : vector<8x128xf32>
    %cst_41 = arith.constant 1.000000e+00 : f32
    %154 = vector.broadcast %cst_41 : f32 to vector<8x128xf32>
    %155 = arith.addf %154, %153 : vector<8x128xf32>
    %156 = arith.divf %154, %155 : vector<8x128xf32>
    %157 = vector.extract_strided_slice %156 {offsets = [0, 0], sizes = [8, 32], strides = [1, 1]} : vector<8x128xf32> to vector<8x32xf32>
    %158 = vector.extract_strided_slice %156 {offsets = [0, 32], sizes = [8, 32], strides = [1, 1]} : vector<8x128xf32> to vector<8x32xf32>
    %159 = vector.extract_strided_slice %156 {offsets = [0, 96], sizes = [8, 32], strides = [1, 1]} : vector<8x128xf32> to vector<8x32xf32>
    %160 = vector.extract_strided_slice %151 {offsets = [0, 64], sizes = [8, 32], strides = [1, 1]} : vector<8x128xf32> to vector<8x32xf32>
    %161 = math.tanh %160 : vector<8x32xf32>
    %162 = arith.mulf %158, %140 : vector<8x32xf32>
    %163 = arith.mulf %157, %161 : vector<8x32xf32>
    %164 = arith.addf %162, %163 : vector<8x32xf32>
    %165 = math.tanh %164 : vector<8x32xf32>
    %166 = arith.mulf %159, %165 : vector<8x32xf32>
    %167 = arith.index_cast %c6_i32 : i32 to index
    %c0_42 = arith.constant 0 : index
    %c0_43 = arith.constant 0 : index
    %168 = vector.load %arg5[%167, %c0_42, %c0_43] : memref<8x8x32xf32, #tpu.memory_space<vmem>>, vector<1x8x32xf32>
    %169 = vector.shape_cast %168 : vector<1x8x32xf32> to vector<8x32xf32>
    %170 = vector.shape_cast %166 : vector<8x32xf32> to vector<1x8x32xf32>
    tpu.vector_store %arg5[%167, %c0_42, %c0_43], %170 {strides = array<i32>} : memref<8x8x32xf32, #tpu.memory_space<vmem>>, vector<1x8x32xf32>,
    %c7_i32 = arith.constant 7 : i32
    %171 = arith.index_cast %c7_i32 : i32 to index
    %c0_44 = arith.constant 0 : index
    %c0_45 = arith.constant 0 : index
    %172 = vector.load %arg0[%171, %c0_44, %c0_45] : memref<8x8x128xf32, #tpu.memory_space<vmem>>, vector<1x8x128xf32>
    %173 = vector.shape_cast %172 : vector<1x8x128xf32> to vector<8x128xf32>
    %cst_46 = arith.constant dense<0.000000e+00> : vector<8x128xf32>
    %174 = tpu.matmul %166, %0, %cst_46 {dimension_numbers = #tpu.dot_dimension_numbers<[1], [0], [0], [1], [0, 0, 1, 1], [], []>} : vector<8x32xf32>, vector<32x128xf32>, vector<8x128xf32> -> vector<8x128xf32>
    %175 = arith.addf %173, %174 : vector<8x128xf32>
    %176 = arith.negf %175 : vector<8x128xf32>
    %177 = math.exp %176 : vector<8x128xf32>
    %cst_47 = arith.constant 1.000000e+00 : f32
    %178 = vector.broadcast %cst_47 : f32 to vector<8x128xf32>
    %179 = arith.addf %178, %177 : vector<8x128xf32>
    %180 = arith.divf %178, %179 : vector<8x128xf32>
    %181 = vector.extract_strided_slice %180 {offsets = [0, 0], sizes = [8, 32], strides = [1, 1]} : vector<8x128xf32> to vector<8x32xf32>
    %182 = vector.extract_strided_slice %180 {offsets = [0, 32], sizes = [8, 32], strides = [1, 1]} : vector<8x128xf32> to vector<8x32xf32>
    %183 = vector.extract_strided_slice %180 {offsets = [0, 96], sizes = [8, 32], strides = [1, 1]} : vector<8x128xf32> to vector<8x32xf32>
    %184 = vector.extract_strided_slice %175 {offsets = [0, 64], sizes = [8, 32], strides = [1, 1]} : vector<8x128xf32> to vector<8x32xf32>
    %185 = math.tanh %184 : vector<8x32xf32>
    %186 = arith.mulf %182, %164 : vector<8x32xf32>
    %187 = arith.mulf %181, %185 : vector<8x32xf32>
    %188 = arith.addf %186, %187 : vector<8x32xf32>
    %189 = math.tanh %188 : vector<8x32xf32>
    %190 = arith.mulf %183, %189 : vector<8x32xf32>
    %191 = arith.index_cast %c7_i32 : i32 to index
    %c0_48 = arith.constant 0 : index
    %c0_49 = arith.constant 0 : index
    %192 = vector.load %arg5[%191, %c0_48, %c0_49] : memref<8x8x32xf32, #tpu.memory_space<vmem>>, vector<1x8x32xf32>
    %193 = vector.shape_cast %192 : vector<1x8x32xf32> to vector<8x32xf32>
    %194 = vector.shape_cast %190 : vector<8x32xf32> to vector<1x8x32xf32>
    tpu.vector_store %arg5[%191, %c0_48, %c0_49], %194 {strides = array<i32>} : memref<8x8x32xf32, #tpu.memory_space<vmem>>, vector<1x8x32xf32>,
    %c8_i32 = arith.constant 8 : i32
    %c0_50 = arith.constant 0 : index
    %c0_51 = arith.constant 0 : index
    %c0_52 = arith.constant 0 : index
    %195 = vector.load %arg5[%c0_50, %c0_51, %c0_52] : memref<8x8x32xf32, #tpu.memory_space<vmem>>, vector<8x8x32xf32>
    %196 = vector.shape_cast %195 : vector<8x8x32xf32> to vector<64x32xf32>
    %c0_53 = arith.constant 0 : index
    %c0_54 = arith.constant 0 : index
    %197 = vector.load %arg2[%c0_53, %c0_54] : memref<32x1xf32, #tpu.memory_space<vmem>>, vector<32x1xf32>
    %cst_55 = arith.constant dense<0.000000e+00> : vector<64x1xf32>
    %198 = tpu.matmul %196, %197, %cst_55 {dimension_numbers = #tpu.dot_dimension_numbers<[1], [0], [0], [1], [0, 0, 1, 1], [], []>} : vector<64x32xf32>, vector<32x1xf32>, vector<64x1xf32> -> vector<64x1xf32>
    %c0_56 = arith.constant 0 : index
    %199 = memref.load %arg3[%c0_56] : memref<1xf32, #tpu.memory_space<smem>>
    %200 = vector.broadcast %199 : f32 to vector<64x1xf32>
    %201 = arith.addf %198, %200 : vector<64x1xf32>
    %c0_57 = arith.constant 0 : index
    %c0_58 = arith.constant 0 : index
    %202 = vector.load %arg4[%c0_57, %c0_58] : memref<64x1xf32, #tpu.memory_space<vmem>>, vector<64x1xf32>
    tpu.vector_store %arg4[%c0_57, %c0_58], %201 {strides = array<i32>} : memref<64x1xf32, #tpu.memory_space<vmem>>, vector<64x1xf32>,
    return
  }
}

</mosaic_0001>

<llo_original>
// kernel: simple_lstm_forward.1
$region0: #{simple_lstm_forward.1}
  #allocation0 [shape = 'u32[]', space=smem, size = 0x4, offset = 0x4, fixed_abs, tag = 'smem constant byte address 0x4 - core index']
  #allocation1 [shape = 'u32[72,128]{1,0:T(1,128)}', space=vmem, size = 0x9000, scoped, tag = 'internal scratch']
  #allocation2 [shape = 'f32[8,8,32]{2,1,0:T(8,128)}', space=vmem, size = 0x8000, scoped, tag = 'scratch operand']
  #allocation3 [shape = 'f32[1]{0:T(128)S(6)}', space=smem, size = 0x200, scoped, tag = 'scoped memory for simple_lstm_forward.1']
  %s0 = inlined_call_operand.vmem [shape: f32[8,8,128], index: 0, kind: input, shape index: {}]
  %s1 = inlined_call_operand.vmem [shape: f32[32,128], index: 1, kind: input, shape index: {}]
  %s2 = inlined_call_operand.vmem [shape: f32[32,1], index: 2, kind: input, shape index: {}]
  %s3 = inlined_call_operand.<no memory space> [shape: f32[1], index: 3, kind: input, shape index: {}]
  %s4 = inlined_call_operand.vmem [shape: f32[64,1], index: 4, kind: output, shape index: {}]
  %s5 = sld [smem:[#allocation0]]
  $region26: #{simple_lstm_forward.1} parent=0
    _
  %s7 = ssub.s32 1, %s5
  %s8 = scalar_select 0, %s7, %s5
  %9 = sst [smem:[#allocation3]] %s3
  // Predicated region
  $region2: #{simple_lstm_forward.1} parent=0 // pred_check
    _
  $region3: #{simple_lstm_forward.1} parent=0 // pred_check_branch
    %11 = sbr.rel (0) target = $region5
  $region4: #{simple_lstm_forward.1} parent=0 // pred_region
    _
  $region5: #{simple_lstm_forward.1} parent=0 // pred_fallthru
    _
  // Predicated region
  $region6: #{simple_lstm_forward.1} parent=0 // pred_check
    _
  $region7: #{simple_lstm_forward.1} parent=0 // pred_check_branch
    %13 = sbr.rel (0) target = $region9
  $region8: #{simple_lstm_forward.1} parent=0 // pred_region
    _
  $region9: #{simple_lstm_forward.1} parent=0 // pred_fallthru
    _
  // Predicated region
  $region10: #{simple_lstm_forward.1} parent=0 // pred_check
    _
  $region11: #{simple_lstm_forward.1} parent=0 // pred_check_branch
    %15 = sbr.rel (0) target = $region13
  $region12: #{simple_lstm_forward.1} parent=0 // pred_region
    _
  $region13: #{simple_lstm_forward.1} parent=0 // pred_fallthru
    _
  // Predicated region
  $region14: #{simple_lstm_forward.1} parent=0 // pred_check
    _
  $region15: #{simple_lstm_forward.1} parent=0 // pred_check_branch
    %17 = sbr.rel (0) target = $region17
  $region16: #{simple_lstm_forward.1} parent=0 // pred_region
    _
  $region17: #{simple_lstm_forward.1} parent=0 // pred_fallthru
    _
  %v18 = vld [vmem:[%s1] sm:$0xff]
  %v19 = vld [vmem:[%s1 + $0x8] sm:$0xff]
  %v20 = vld [vmem:[%s1 + $0x10] sm:$0xff]
  %v21 = vld [vmem:[%s1 + $0x18] sm:$0xff]
  %v22 = vld [vmem:[%s0] sm:$0xff]
  %vm23 = vcmask 261120
  %v25 = vsel %vm23, 0.0, 0
  %27 = vmatpush.msra.mxu0 0.0
  %28 = vmatpush.msra.mxu0 0.0
  %29 = vmatpush.msra.mxu0 0.0
  %30 = vmatpush.msra.mxu0 0.0
  %31 = vmatpush.msra.mxu0 0.0
  %32 = vmatpush.msra.mxu0 0.0
  %33 = vmatpush.msra.mxu0 0.0
  %34 = vmatpush.msra.mxu0 0.0
  %35 = vmatpush.msra.mxu0 0.0
  %36 = vmatpush.msra.mxu0 0.0
  %37 = vmatpush.msra.mxu0 0.0
  %38 = vmatpush.msra.mxu0 0.0
  %39 = vmatpush.msra.mxu0 %v21
  %40 = vmatpush.msra.mxu0 %v20
  %41 = vmatpush.msra.mxu0 %v19
  %42 = vmatpush.msra.mxu0 %v18
  %43 = vmatmul.f32.gmra.mxu0 %v25
  %v44 = vpop.f32.mrf.mxu0
  %v45 = vadd.f32 0.0, %v44
  %46 = vdwg.mxu0
  %v47 = vadd.f32 %v22, %v45
  %v48 = vxor.u32 %v47, 2147483648
  %v49 = vmul.f32 %v48, 1.442695
  %v50 = vpow.pop %v49
  %v51 = vadd.f32 %v50, 1.0
  %v52 = vrcp.pop %v51
  %v53 = vmul.f32 %v51, %v52
  %v54 = vsub.f32 1.0, %v53
  %v55 = vmul.f32 %v52, %v54
  %v56 = vadd.f32 %v52, %v55
  %vm57 = vweird.f32 %v51
  %vm58 = vweird.f32 %v52
  %vm59 = vmor %vm57, %vm58
  %v60 = vsel %vm59, %v52, %v56
  %v61 = vand.u32 2147483647, %v51
  %vm62 = vcmp.eq.f32.partialorder %v61, 8.507059e+37
  %v63 = vand.u32 %v51, 2147483648
  %v64 = vor.u32 1.1754944e-38, %v63
  %v65 = vsel %vm62, %v64, %v60
  %v66 = vmul.f32 1.0, %v65
  %v67 = vtanh.pop %v47
  %v68 = vmul.f32 %v66, 0.0
  %70 = vrot.lane.b32.xlu0 %v67, 64
  %v71 = vpop.permute.xlu0 %70
  %v73 = vmul.f32 %v66, %v71
  %75 = vrot.lane.b32.xlu0 %v73, 32
  %v76 = vpop.permute.xlu0 %75
  %v78 = vadd.f32 %v68, %v76
  %v79 = vtanh.pop %v78
  %81 = vrot.lane.b32.xlu0 %v79, 64
  %v82 = vpop.permute.xlu0 %81
  %v84 = vmul.f32 %v66, %v82
  %86 = vrot.lane.b32.xlu0 %v84, 32
  %v87 = vpop.permute.xlu0 %86
  %89 = vst.msk [vmem:[#allocation2] sm:$0xff] %vm23, %v87
  %s90 = scalar_lea.vmem %s0, 8
  %v91 = vld [vmem:[%s90] sm:$0xff]
  %v92 = vsel %vm23, %v87, 0
  %94 = vmatpush.msra.mxu0 0.0
  %95 = vmatpush.msra.mxu0 0.0
  %96 = vmatpush.msra.mxu0 0.0
  %97 = vmatpush.msra.mxu0 0.0
  %98 = vmatpush.msra.mxu0 0.0
  %99 = vmatpush.msra.mxu0 0.0
  %100 = vmatpush.msra.mxu0 0.0
  %101 = vmatpush.msra.mxu0 0.0
  %102 = vmatpush.msra.mxu0 0.0
  %103 = vmatpush.msra.mxu0 0.0
  %104 = vmatpush.msra.mxu0 0.0
  %105 = vmatpush.msra.mxu0 0.0
  %106 = vmatpush.msra.mxu0 %v21
  %107 = vmatpush.msra.mxu0 %v20
  %108 = vmatpush.msra.mxu0 %v19
  %109 = vmatpush.msra.mxu0 %v18
  %110 = vmatmul.f32.gmra.mxu0 %v92
  %v111 = vpop.f32.mrf.mxu0
  %v112 = vadd.f32 0.0, %v111
  %113 = vdwg.mxu0
  %v114 = vadd.f32 %v91, %v112
  %v115 = vxor.u32 %v114, 2147483648
  %v116 = vmul.f32 %v115, 1.442695
  %v117 = vpow.pop %v116
  %v118 = vadd.f32 %v117, 1.0
  %v119 = vrcp.pop %v118
  %v120 = vmul.f32 %v118, %v119
  %v121 = vsub.f32 1.0, %v120
  %v122 = vmul.f32 %v119, %v121
  %v123 = vadd.f32 %v119, %v122
  %vm124 = vweird.f32 %v118
  %vm125 = vweird.f32 %v119
  %vm126 = vmor %vm124, %vm125
  %v127 = vsel %vm126, %v119, %v123
  %v128 = vand.u32 2147483647, %v118
  %vm129 = vcmp.eq.f32.partialorder %v128, 8.507059e+37
  %v130 = vand.u32 %v118, 2147483648
  %v131 = vor.u32 1.1754944e-38, %v130
  %v132 = vsel %vm129, %v131, %v127
  %v133 = vmul.f32 1.0, %v132
  %v134 = vtanh.pop %v114
  %v135 = vmul.f32 %v133, %v78
  %137 = vrot.lane.b32.xlu0 %v134, 64
  %v138 = vpop.permute.xlu0 %137
  %v140 = vmul.f32 %v133, %v138
  %142 = vrot.lane.b32.xlu0 %v140, 32
  %v143 = vpop.permute.xlu0 %142
  %v145 = vadd.f32 %v135, %v143
  %v146 = vtanh.pop %v145
  %148 = vrot.lane.b32.xlu0 %v146, 64
  %v149 = vpop.permute.xlu0 %148
  %v151 = vmul.f32 %v133, %v149
  %153 = vrot.lane.b32.xlu0 %v151, 32
  %v154 = vpop.permute.xlu0 %153
  %s156 = scalar_lea.vmem [#allocation2], 8
  %157 = vst.msk [vmem:[%s156] sm:$0xff] %vm23, %v154
  %s158 = scalar_lea.vmem %s0, 16
  %v159 = vld [vmem:[%s158] sm:$0xff]
  %v160 = vsel %vm23, %v154, 0
  %162 = vmatpush.msra.mxu0 0.0
  %163 = vmatpush.msra.mxu0 0.0
  %164 = vmatpush.msra.mxu0 0.0
  %165 = vmatpush.msra.mxu0 0.0
  %166 = vmatpush.msra.mxu0 0.0
  %167 = vmatpush.msra.mxu0 0.0
  %168 = vmatpush.msra.mxu0 0.0
  %169 = vmatpush.msra.mxu0 0.0
  %170 = vmatpush.msra.mxu0 0.0
  %171 = vmatpush.msra.mxu0 0.0
  %172 = vmatpush.msra.mxu0 0.0
  %173 = vmatpush.msra.mxu0 0.0
  %174 = vmatpush.msra.mxu0 %v21
  %175 = vmatpush.msra.mxu0 %v20
  %176 = vmatpush.msra.mxu0 %v19
  %177 = vmatpush.msra.mxu0 %v18
  %178 = vmatmul.f32.gmra.mxu0 %v160
  %v179 = vpop.f32.mrf.mxu0
  %v180 = vadd.f32 0.0, %v179
  %181 = vdwg.mxu0
  %v182 = vadd.f32 %v159, %v180
  %v183 = vxor.u32 %v182, 2147483648
  %v184 = vmul.f32 %v183, 1.442695
  %v185 = vpow.pop %v184
  %v186 = vadd.f32 %v185, 1.0
  %v187 = vrcp.pop %v186
  %v188 = vmul.f32 %v186, %v187
  %v189 = vsub.f32 1.0, %v188
  %v190 = vmul.f32 %v187, %v189
  %v191 = vadd.f32 %v187, %v190
  %vm192 = vweird.f32 %v186
  %vm193 = vweird.f32 %v187
  %vm194 = vmor %vm192, %vm193
  %v195 = vsel %vm194, %v187, %v191
  %v196 = vand.u32 2147483647, %v186
  %vm197 = vcmp.eq.f32.partialorder %v196, 8.507059e+37
  %v198 = vand.u32 %v186, 2147483648
  %v199 = vor.u32 1.1754944e-38, %v198
  %v200 = vsel %vm197, %v199, %v195
  %v201 = vmul.f32 1.0, %v200
  %v202 = vtanh.pop %v182
  %v203 = vmul.f32 %v201, %v145
  %205 = vrot.lane.b32.xlu0 %v202, 64
  %v206 = vpop.permute.xlu0 %205
  %v208 = vmul.f32 %v201, %v206
  %210 = vrot.lane.b32.xlu0 %v208, 32
  %v211 = vpop.permute.xlu0 %210
  %v213 = vadd.f32 %v203, %v211
  %v214 = vtanh.pop %v213
  %216 = vrot.lane.b32.xlu0 %v214, 64
  %v217 = vpop.permute.xlu0 %216
  %v219 = vmul.f32 %v201, %v217
  %221 = vrot.lane.b32.xlu0 %v219, 32
  %v222 = vpop.permute.xlu0 %221
  %s224 = scalar_lea.vmem [#allocation2], 16
  %225 = vst.msk [vmem:[%s224] sm:$0xff] %vm23, %v222
  %s226 = scalar_lea.vmem %s0, 24
  %v227 = vld [vmem:[%s226] sm:$0xff]
  %v228 = vsel %vm23, %v222, 0
  %230 = vmatpush.msra.mxu0 0.0
  %231 = vmatpush.msra.mxu0 0.0
  %232 = vmatpush.msra.mxu0 0.0
  %233 = vmatpush.msra.mxu0 0.0
  %234 = vmatpush.msra.mxu0 0.0
  %235 = vmatpush.msra.mxu0 0.0
  %236 = vmatpush.msra.mxu0 0.0
  %237 = vmatpush.msra.mxu0 0.0
  %238 = vmatpush.msra.mxu0 0.0
  %239 = vmatpush.msra.mxu0 0.0
  %240 = vmatpush.msra.mxu0 0.0
  %241 = vmatpush.msra.mxu0 0.0
  %242 = vmatpush.msra.mxu0 %v21
  %243 = vmatpush.msra.mxu0 %v20
  %244 = vmatpush.msra.mxu0 %v19
  %245 = vmatpush.msra.mxu0 %v18
  %246 = vmatmul.f32.gmra.mxu0 %v228
  %v247 = vpop.f32.mrf.mxu0
  %v248 = vadd.f32 0.0, %v247
  %249 = vdwg.mxu0
  %v250 = vadd.f32 %v227, %v248
  %v251 = vxor.u32 %v250, 2147483648
  %v252 = vmul.f32 %v251, 1.442695
  %v253 = vpow.pop %v252
  %v254 = vadd.f32 %v253, 1.0
  %v255 = vrcp.pop %v254
  %v256 = vmul.f32 %v254, %v255
  %v257 = vsub.f32 1.0, %v256
  %v258 = vmul.f32 %v255, %v257
  %v259 = vadd.f32 %v255, %v258
  %vm260 = vweird.f32 %v254
  %vm261 = vweird.f32 %v255
  %vm262 = vmor %vm260, %vm261
  %v263 = vsel %vm262, %v255, %v259
  %v264 = vand.u32 2147483647, %v254
  %vm265 = vcmp.eq.f32.partialorder %v264, 8.507059e+37
  %v266 = vand.u32 %v254, 2147483648
  %v267 = vor.u32 1.1754944e-38, %v266
  %v268 = vsel %vm265, %v267, %v263
  %v269 = vmul.f32 1.0, %v268
  %v270 = vtanh.pop %v250
  %v271 = vmul.f32 %v269, %v213
  %273 = vrot.lane.b32.xlu0 %v270, 64
  %v274 = vpop.permute.xlu0 %273
  %v276 = vmul.f32 %v269, %v274
  %278 = vrot.lane.b32.xlu0 %v276, 32
  %v279 = vpop.permute.xlu0 %278
  %v281 = vadd.f32 %v271, %v279
  %v282 = vtanh.pop %v281
  %284 = vrot.lane.b32.xlu0 %v282, 64
  %v285 = vpop.permute.xlu0 %284
  %v287 = vmul.f32 %v269, %v285
  %289 = vrot.lane.b32.xlu0 %v287, 32
  %v290 = vpop.permute.xlu0 %289
  %s292 = scalar_lea.vmem [#allocation2], 24
  %293 = vst.msk [vmem:[%s292] sm:$0xff] %vm23, %v290
  %s294 = scalar_lea.vmem %s0, 32
  %v295 = vld [vmem:[%s294] sm:$0xff]
  %v296 = vsel %vm23, %v290, 0
  %298 = vmatpush.msra.mxu0 0.0
  %299 = vmatpush.msra.mxu0 0.0
  %300 = vmatpush.msra.mxu0 0.0
  %301 = vmatpush.msra.mxu0 0.0
  %302 = vmatpush.msra.mxu0 0.0
  %303 = vmatpush.msra.mxu0 0.0
  %304 = vmatpush.msra.mxu0 0.0
  %305 = vmatpush.msra.mxu0 0.0
  %306 = vmatpush.msra.mxu0 0.0
  %307 = vmatpush.msra.mxu0 0.0
  %308 = vmatpush.msra.mxu0 0.0
  %309 = vmatpush.msra.mxu0 0.0
  %310 = vmatpush.msra.mxu0 %v21
  %311 = vmatpush.msra.mxu0 %v20
  %312 = vmatpush.msra.mxu0 %v19
  %313 = vmatpush.msra.mxu0 %v18
  %314 = vmatmul.f32.gmra.mxu0 %v296
  %v315 = vpop.f32.mrf.mxu0
  %v316 = vadd.f32 0.0, %v315
  %317 = vdwg.mxu0
  %v318 = vadd.f32 %v295, %v316
  %v319 = vxor.u32 %v318, 2147483648
  %v320 = vmul.f32 %v319, 1.442695
  %v321 = vpow.pop %v320
  %v322 = vadd.f32 %v321, 1.0
  %v323 = vrcp.pop %v322
  %v324 = vmul.f32 %v322, %v323
  %v325 = vsub.f32 1.0, %v324
  %v326 = vmul.f32 %v323, %v325
  %v327 = vadd.f32 %v323, %v326
  %vm328 = vweird.f32 %v322
  %vm329 = vweird.f32 %v323
  %vm330 = vmor %vm328, %vm329
  %v331 = vsel %vm330, %v323, %v327
  %v332 = vand.u32 2147483647, %v322
  %vm333 = vcmp.eq.f32.partialorder %v332, 8.507059e+37
  %v334 = vand.u32 %v322, 2147483648
  %v335 = vor.u32 1.1754944e-38, %v334
  %v336 = vsel %vm333, %v335, %v331
  %v337 = vmul.f32 1.0, %v336
  %v338 = vtanh.pop %v318
  %v339 = vmul.f32 %v337, %v281
  %341 = vrot.lane.b32.xlu0 %v338, 64
  %v342 = vpop.permute.xlu0 %341
  %v344 = vmul.f32 %v337, %v342
  %346 = vrot.lane.b32.xlu0 %v344, 32
  %v347 = vpop.permute.xlu0 %346
  %v349 = vadd.f32 %v339, %v347
  %v350 = vtanh.pop %v349
  %352 = vrot.lane.b32.xlu0 %v350, 64
  %v353 = vpop.permute.xlu0 %352
  %v355 = vmul.f32 %v337, %v353
  %357 = vrot.lane.b32.xlu0 %v355, 32
  %v358 = vpop.permute.xlu0 %357
  %s360 = scalar_lea.vmem [#allocation2], 32
  %361 = vst.msk [vmem:[%s360] sm:$0xff] %vm23, %v358
  %s362 = scalar_lea.vmem %s0, 40
  %v363 = vld [vmem:[%s362] sm:$0xff]
  %v364 = vsel %vm23, %v358, 0
  %366 = vmatpush.msra.mxu0 0.0
  %367 = vmatpush.msra.mxu0 0.0
  %368 = vmatpush.msra.mxu0 0.0
  %369 = vmatpush.msra.mxu0 0.0
  %370 = vmatpush.msra.mxu0 0.0
  %371 = vmatpush.msra.mxu0 0.0
  %372 = vmatpush.msra.mxu0 0.0
  %373 = vmatpush.msra.mxu0 0.0
  %374 = vmatpush.msra.mxu0 0.0
  %375 = vmatpush.msra.mxu0 0.0
  %376 = vmatpush.msra.mxu0 0.0
  %377 = vmatpush.msra.mxu0 0.0
  %378 = vmatpush.msra.mxu0 %v21
  %379 = vmatpush.msra.mxu0 %v20
  %380 = vmatpush.msra.mxu0 %v19
  %381 = vmatpush.msra.mxu0 %v18
  %382 = vmatmul.f32.gmra.mxu0 %v364
  %v383 = vpop.f32.mrf.mxu0
  %v384 = vadd.f32 0.0, %v383
  %385 = vdwg.mxu0
  %v386 = vadd.f32 %v363, %v384
  %v387 = vxor.u32 %v386, 2147483648
  %v388 = vmul.f32 %v387, 1.442695
  %v389 = vpow.pop %v388
  %v390 = vadd.f32 %v389, 1.0
  %v391 = vrcp.pop %v390
  %v392 = vmul.f32 %v390, %v391
  %v393 = vsub.f32 1.0, %v392
  %v394 = vmul.f32 %v391, %v393
  %v395 = vadd.f32 %v391, %v394
  %vm396 = vweird.f32 %v390
  %vm397 = vweird.f32 %v391
  %vm398 = vmor %vm396, %vm397
  %v399 = vsel %vm398, %v391, %v395
  %v400 = vand.u32 2147483647, %v390
  %vm401 = vcmp.eq.f32.partialorder %v400, 8.507059e+37
  %v402 = vand.u32 %v390, 2147483648
  %v403 = vor.u32 1.1754944e-38, %v402
  %v404 = vsel %vm401, %v403, %v399
  %v405 = vmul.f32 1.0, %v404
  %v406 = vtanh.pop %v386
  %v407 = vmul.f32 %v405, %v349
  %409 = vrot.lane.b32.xlu0 %v406, 64
  %v410 = vpop.permute.xlu0 %409
  %v412 = vmul.f32 %v405, %v410
  %414 = vrot.lane.b32.xlu0 %v412, 32
  %v415 = vpop.permute.xlu0 %414
  %v417 = vadd.f32 %v407, %v415
  %v418 = vtanh.pop %v417
  %420 = vrot.lane.b32.xlu0 %v418, 64
  %v421 = vpop.permute.xlu0 %420
  %v423 = vmul.f32 %v405, %v421
  %425 = vrot.lane.b32.xlu0 %v423, 32
  %v426 = vpop.permute.xlu0 %425
  %s428 = scalar_lea.vmem [#allocation2], 40
  %429 = vst.msk [vmem:[%s428] sm:$0xff] %vm23, %v426
  %s430 = scalar_lea.vmem %s0, 48
  %v431 = vld [vmem:[%s430] sm:$0xff]
  %v432 = vsel %vm23, %v426, 0
  %434 = vmatpush.msra.mxu0 0.0
  %435 = vmatpush.msra.mxu0 0.0
  %436 = vmatpush.msra.mxu0 0.0
  %437 = vmatpush.msra.mxu0 0.0
  %438 = vmatpush.msra.mxu0 0.0
  %439 = vmatpush.msra.mxu0 0.0
  %440 = vmatpush.msra.mxu0 0.0
  %441 = vmatpush.msra.mxu0 0.0
  %442 = vmatpush.msra.mxu0 0.0
  %443 = vmatpush.msra.mxu0 0.0
  %444 = vmatpush.msra.mxu0 0.0
  %445 = vmatpush.msra.mxu0 0.0
  %446 = vmatpush.msra.mxu0 %v21
  %447 = vmatpush.msra.mxu0 %v20
  %448 = vmatpush.msra.mxu0 %v19
  %449 = vmatpush.msra.mxu0 %v18
  %450 = vmatmul.f32.gmra.mxu0 %v432
  %v451 = vpop.f32.mrf.mxu0
  %v452 = vadd.f32 0.0, %v451
  %453 = vdwg.mxu0
  %v454 = vadd.f32 %v431, %v452
  %v455 = vxor.u32 %v454, 2147483648
  %v456 = vmul.f32 %v455, 1.442695
  %v457 = vpow.pop %v456
  %v458 = vadd.f32 %v457, 1.0
  %v459 = vrcp.pop %v458
  %v460 = vmul.f32 %v458, %v459
  %v461 = vsub.f32 1.0, %v460
  %v462 = vmul.f32 %v459, %v461
  %v463 = vadd.f32 %v459, %v462
  %vm464 = vweird.f32 %v458
  %vm465 = vweird.f32 %v459
  %vm466 = vmor %vm464, %vm465
  %v467 = vsel %vm466, %v459, %v463
  %v468 = vand.u32 2147483647, %v458
  %vm469 = vcmp.eq.f32.partialorder %v468, 8.507059e+37
  %v470 = vand.u32 %v458, 2147483648
  %v471 = vor.u32 1.1754944e-38, %v470
  %v472 = vsel %vm469, %v471, %v467
  %v473 = vmul.f32 1.0, %v472
  %v474 = vtanh.pop %v454
  %v475 = vmul.f32 %v473, %v417
  %477 = vrot.lane.b32.xlu0 %v474, 64
  %v478 = vpop.permute.xlu0 %477
  %v480 = vmul.f32 %v473, %v478
  %482 = vrot.lane.b32.xlu0 %v480, 32
  %v483 = vpop.permute.xlu0 %482
  %v485 = vadd.f32 %v475, %v483
  %v486 = vtanh.pop %v485
  %488 = vrot.lane.b32.xlu0 %v486, 64
  %v489 = vpop.permute.xlu0 %488
  %v491 = vmul.f32 %v473, %v489
  %493 = vrot.lane.b32.xlu0 %v491, 32
  %v494 = vpop.permute.xlu0 %493
  %s496 = scalar_lea.vmem [#allocation2], 48
  %497 = vst.msk [vmem:[%s496] sm:$0xff] %vm23, %v494
  %s498 = scalar_lea.vmem %s0, 56
  %v499 = vld [vmem:[%s498] sm:$0xff]
  %v500 = vsel %vm23, %v494, 0
  %502 = vmatpush.msra.mxu0 0.0
  %503 = vmatpush.msra.mxu0 0.0
  %504 = vmatpush.msra.mxu0 0.0
  %505 = vmatpush.msra.mxu0 0.0
  %506 = vmatpush.msra.mxu0 0.0
  %507 = vmatpush.msra.mxu0 0.0
  %508 = vmatpush.msra.mxu0 0.0
  %509 = vmatpush.msra.mxu0 0.0
  %510 = vmatpush.msra.mxu0 0.0
  %511 = vmatpush.msra.mxu0 0.0
  %512 = vmatpush.msra.mxu0 0.0
  %513 = vmatpush.msra.mxu0 0.0
  %514 = vmatpush.msra.mxu0 %v21
  %515 = vmatpush.msra.mxu0 %v20
  %516 = vmatpush.msra.mxu0 %v19
  %517 = vmatpush.msra.mxu0 %v18
  %518 = vmatmul.f32.gmra.mxu0 %v500
  %v519 = vpop.f32.mrf.mxu0
  %v520 = vadd.f32 0.0, %v519
  %521 = vdwg.mxu0
  %v522 = vadd.f32 %v499, %v520
  %v523 = vxor.u32 %v522, 2147483648
  %v524 = vmul.f32 %v523, 1.442695
  %v525 = vpow.pop %v524
  %v526 = vadd.f32 %v525, 1.0
  %v527 = vrcp.pop %v526
  %v528 = vmul.f32 %v526, %v527
  %v529 = vsub.f32 1.0, %v528
  %v530 = vmul.f32 %v527, %v529
  %v531 = vadd.f32 %v527, %v530
  %vm532 = vweird.f32 %v526
  %vm533 = vweird.f32 %v527
  %vm534 = vmor %vm532, %vm533
  %v535 = vsel %vm534, %v527, %v531
  %v536 = vand.u32 2147483647, %v526
  %vm537 = vcmp.eq.f32.partialorder %v536, 8.507059e+37
  %v538 = vand.u32 %v526, 2147483648
  %v539 = vor.u32 1.1754944e-38, %v538
  %v540 = vsel %vm537, %v539, %v535
  %v541 = vmul.f32 1.0, %v540
  %v542 = vtanh.pop %v522
  %v543 = vmul.f32 %v541, %v485
  %545 = vrot.lane.b32.xlu0 %v542, 64
  %v546 = vpop.permute.xlu0 %545
  %v548 = vmul.f32 %v541, %v546
  %550 = vrot.lane.b32.xlu0 %v548, 32
  %v551 = vpop.permute.xlu0 %550
  %v553 = vadd.f32 %v543, %v551
  %v554 = vtanh.pop %v553
  %556 = vrot.lane.b32.xlu0 %v554, 64
  %v557 = vpop.permute.xlu0 %556
  %v559 = vmul.f32 %v541, %v557
  %561 = vrot.lane.b32.xlu0 %v559, 32
  %v562 = vpop.permute.xlu0 %561
  %s564 = scalar_lea.vmem [#allocation2], 56
  %565 = vst.msk [vmem:[%s564] sm:$0xff] %vm23, %v562
  %v566 = vld [vmem:[#allocation2] sm:$0xff]
  %v567 = vld [vmem:[#allocation2 + $0x8] sm:$0xff]
  %v568 = vld [vmem:[#allocation2 + $0x10] sm:$0xff]
  %v569 = vld [vmem:[#allocation2 + $0x18] sm:$0xff]
  %v570 = vld [vmem:[#allocation2 + $0x20] sm:$0xff]
  %v571 = vld [vmem:[#allocation2 + $0x28] sm:$0xff]
  %v572 = vld [vmem:[#allocation2 + $0x30] sm:$0xff]
  %v573 = vld [vmem:[#allocation2 + $0x38] sm:$0xff]
  %v574 = vld [vmem:[%s2] sm:$0xff]
  %v575 = vld [vmem:[%s2 + $0x8] sm:$0xff]
  %v576 = vld [vmem:[%s2 + $0x10] sm:$0xff]
  %v577 = vld [vmem:[%s2 + $0x18] sm:$0xff]
  %s578 = sld [smem:[#allocation3]]
  %v579 = vstv %s578
  %v581 = vsel %vm23, %v566, 0
  %v584 = vsel %vm23, %v567, 0
  %v587 = vsel %vm23, %v568, 0
  %v590 = vsel %vm23, %v569, 0
  %v593 = vsel %vm23, %v570, 0
  %v596 = vsel %vm23, %v571, 0
  %v599 = vsel %vm23, %v572, 0
  %v602 = vsel %vm23, %v573, 0
  %604 = vmatpush.msra.mxu0 0.0
  %605 = vmatpush.msra.mxu0 0.0
  %606 = vmatpush.msra.mxu0 0.0
  %607 = vmatpush.msra.mxu0 0.0
  %608 = vmatpush.msra.mxu0 0.0
  %609 = vmatpush.msra.mxu0 0.0
  %610 = vmatpush.msra.mxu0 0.0
  %611 = vmatpush.msra.mxu0 0.0
  %612 = vmatpush.msra.mxu0 0.0
  %613 = vmatpush.msra.mxu0 0.0
  %614 = vmatpush.msra.mxu0 0.0
  %615 = vmatpush.msra.mxu0 0.0
  %616 = vmatpush.msra.mxu0 %v577
  %617 = vmatpush.msra.mxu0 %v576
  %618 = vmatpush.msra.mxu0 %v575
  %619 = vmatpush.msra.mxu0 %v574
  %620 = vmatmul.f32.gmra.mxu0 %v581
  %v621 = vpop.f32.mrf.mxu0
  %v622 = vadd.f32 %v579, %v621
  %623 = vmatmul.f32.gmra.mxu0 %v584
  %v624 = vpop.f32.mrf.mxu0
  %v625 = vadd.f32 %v579, %v624
  %626 = vmatmul.f32.gmra.mxu0 %v587
  %v627 = vpop.f32.mrf.mxu0
  %v628 = vadd.f32 %v579, %v627
  %629 = vmatmul.f32.gmra.mxu0 %v590
  %v630 = vpop.f32.mrf.mxu0
  %v631 = vadd.f32 %v579, %v630
  %632 = vmatmul.f32.gmra.mxu0 %v593
  %v633 = vpop.f32.mrf.mxu0
  %v634 = vadd.f32 %v579, %v633
  %635 = vmatmul.f32.gmra.mxu0 %v596
  %v636 = vpop.f32.mrf.mxu0
  %v637 = vadd.f32 %v579, %v636
  %638 = vmatmul.f32.gmra.mxu0 %v599
  %v639 = vpop.f32.mrf.mxu0
  %v640 = vadd.f32 %v579, %v639
  %641 = vmatmul.f32.gmra.mxu0 %v602
  %v642 = vpop.f32.mrf.mxu0
  %v643 = vadd.f32 %v579, %v642
  %644 = vdwg.mxu0
  %vm645 = vcmask 7168
  %646 = vst.msk [vmem:[%s4] sm:$0xff] %vm645, %v622
  %647 = vst.msk [vmem:[%s4 + $0x8] sm:$0xff] %vm645, %v625
  %648 = vst.msk [vmem:[%s4 + $0x10] sm:$0xff] %vm645, %v628
  %649 = vst.msk [vmem:[%s4 + $0x18] sm:$0xff] %vm645, %v631
  %650 = vst.msk [vmem:[%s4 + $0x20] sm:$0xff] %vm645, %v634
  %651 = vst.msk [vmem:[%s4 + $0x28] sm:$0xff] %vm645, %v637
  %652 = vst.msk [vmem:[%s4 + $0x30] sm:$0xff] %vm645, %v640
  %653 = vst.msk [vmem:[%s4 + $0x38] sm:$0xff] %vm645, %v643
  // Predicated region
  $region18: #{simple_lstm_forward.1} parent=0 // pred_check
    _
  $region19: #{simple_lstm_forward.1} parent=0 // pred_check_branch
    %655 = sbr.rel (0) target = $region21
  $region20: #{simple_lstm_forward.1} parent=0 // pred_region
    _
  $region21: #{simple_lstm_forward.1} parent=0 // pred_fallthru
    _
  // Predicated region
  $region22: #{simple_lstm_forward.1} parent=0 // pred_check
    _
  $region23: #{simple_lstm_forward.1} parent=0 // pred_check_branch
    %657 = sbr.rel (0) target = $region25
  $region24: #{simple_lstm_forward.1} parent=0 // pred_region
    _
  $region25: #{simple_lstm_forward.1} parent=0 // pred_fallthru
    _

</llo_original>
